<compile_context>
chip_gen: v6e
topology: v6e:2x2x1
jax: 0.10.0
libtpu: 0.0.40
codegen_flags: <defaults>
</compile_context>

<pallas_src>
import jax
import jax.numpy as jnp
from jax.experimental import pallas as pl
from jax.experimental.pallas import tpu as pltpu

LANES = 128
TARGET_BLOCK_BYTES = 2 * 1024 * 1024  # ~2 MiB blocks for the tiled fallback


# ----------------------------------------------------------------------------
# Primary path: one HBM -> HBM DMA (no VMEM round trip, no grid).
# ----------------------------------------------------------------------------
def _dma_identity_kernel(x_hbm_ref, o_hbm_ref, sem):
    cp = pltpu.make_async_copy(x_hbm_ref, o_hbm_ref, sem)
    cp.start()
    cp.wait()


def _identity_dma(x):
    n_bytes = int(x.size) * jnp.dtype(x.dtype).itemsize
    return pl.pallas_call(
        _dma_identity_kernel,
        out_shape=jax.ShapeDtypeStruct(x.shape, x.dtype),
        in_specs=[pl.BlockSpec(memory_space=pl.ANY)],
        out_specs=pl.BlockSpec(memory_space=pl.ANY),
        scratch_shapes=[pltpu.SemaphoreType.DMA(())],
        cost_estimate=pl.CostEstimate(
            flops=0, transcendentals=0, bytes_accessed=2 * n_bytes),
    )(x)


# ----------------------------------------------------------------------------
# Fallback path: lane-dense tiled VMEM copy (byte-targeted, dtype-aware tiles).
# ----------------------------------------------------------------------------
def _copy_kernel(x_ref, o_ref):
    o_ref[...] = x_ref[...]


def _round_up(a, b):
    return ((a + b - 1) // b) * b


def _identity_tiled(x):
    orig_shape = x.shape
    dtype = x.dtype
    itemsize = jnp.dtype(dtype).itemsize
    sublane = max(8, 32 // itemsize)  # 8 for f32, 16 for bf16, 32 for int8/fp8
    n = int(x.size)

    flat = x.reshape(-1)
    rows = pl.cdiv(n, LANES)
    padded_n = rows * LANES
    if padded_n != n:
        # Only non-multiple-of-128 sizes pay the pad/unpad copies.
        flat = jnp.pad(flat, (0, padded_n - n))
    x2d = flat.reshape(rows, LANES)

    # Byte-targeted tile rows (~2 MiB/block), rounded to the dtype-native
    # sublane multiple so every DMA / vst is a full unmasked vreg.
    tile_rows = max(
        sublane,
        (TARGET_BLOCK_BYTES // (LANES * itemsize)) // sublane * sublane,
    )
    tile_rows = min(tile_rows, _round_up(rows, sublane))

    grid = (pl.cdiv(rows, tile_rows),)  # ragged last block handled by Pallas

    out2d = pl.pallas_call(
        _copy_kernel,
        out_shape=jax.ShapeDtypeStruct((rows, LANES), dtype),
        grid=grid,
        in_specs=[pl.BlockSpec((tile_rows, LANES), lambda i: (i, 0))],
        out_specs=pl.BlockSpec((tile_rows, LANES), lambda i: (i, 0)),
        compiler_params=pltpu.CompilerParams(
            dimension_semantics=("parallel",)),
        cost_estimate=pl.CostEstimate(
            flops=0, transcendentals=0, bytes_accessed=2 * n * itemsize),
    )(x2d)

    out_flat = out2d.reshape(-1)
    if padded_n != n:
        out_flat = out_flat[:n]
    return out_flat.reshape(orig_shape)


# ----------------------------------------------------------------------------
# Public wrapper: forward(x) = x
# ----------------------------------------------------------------------------
def identity(x, *, use_dma=True):
    """Pallas Identity: returns an array equal to `x` (same shape & dtype)."""
    if x.size == 0:
        return x  # nothing to copy
    if use_dma:
        return _identity_dma(x)
    return _identity_tiled(x)


if __name__ == "__main__":
    key = jax.random.PRNGKey(0)

    N, C, H, W = 2, 4, 16, 16
    x = jax.random.normal(key, (N, C, H, W), dtype=jnp.float32)

    # Primary (HBM->HBM DMA) path.
    out = jax.block_until_ready(identity(x))
    assert out.shape == x.shape and out.dtype == x.dtype
    # Bitwise comparison (robust even if inputs contained NaNs).
    assert jnp.array_equal(
        out.view(jnp.int32), x.view(jnp.int32)
    ), "DMA identity output differs from input"

    # Tiled fallback path (sanity check).
    out_t = jax.block_until_ready(identity(x, use_dma=False))
    assert out_t.shape == x.shape and out_t.dtype == x.dtype
    assert jnp.array_equal(
        out_t.view(jnp.int32), x.view(jnp.int32)
    ), "Tiled identity output differs from input"

    print("KERNEL_OK")
</pallas_src>

<mosaic_0001>
module attributes {stable_mosaic.version = 11 : i64} {
  func.func @_dma_identity_kernel(%arg0: memref<2x4x16x16xf32, #tpu.memory_space<any>>, %arg1: memref<2x4x16x16xf32, #tpu.memory_space<any>>, %arg2: memref<!tpu.dma_semaphore, #tpu.memory_space<semaphore_mem>>) attributes {dimension_semantics = [], scalar_prefetch = 0 : i64, scratch_operands = 1 : i64, tpu.core_type = #tpu.core_type<tc>} {
    tpu.enqueue_dma source(%arg0 : memref<2x4x16x16xf32, #tpu.memory_space<any>>) target(%arg1 : memref<2x4x16x16xf32, #tpu.memory_space<any>>) target_semaphore(%arg2 : memref<!tpu.dma_semaphore, #tpu.memory_space<semaphore_mem>>)
    tpu.wait_dma2 semaphore(%arg2 : memref<!tpu.dma_semaphore, #tpu.memory_space<semaphore_mem>>) src(%arg0 : memref<2x4x16x16xf32, #tpu.memory_space<any>>) dst(%arg1 : memref<2x4x16x16xf32, #tpu.memory_space<any>>)
    return
  }
}

</mosaic_0001>

<llo_original>
// kernel: tpu_custom_call.1
$region0: #{tpu_custom_call.1}
  #allocation0 [shape = 'u32[]', space=smem, size = 0x4, offset = 0x4, fixed_abs, tag = 'smem constant byte address 0x4 - core index']
  #allocation1 [shape = 'u32[144,128]{1,0:T(1,128)}', space=vmem, size = 0x12000, scoped, tag = 'internal scratch']
  #allocation2 [shape = 's32[1]{0}', space=sflag, size = 0x4, scoped, tag = 'scratch operand']
  #allocation3 [shape = 's32[]', space=sflag, size = 0x4, offset = 0, fixed_abs, tag = 'sflag constant byte address 0x0 - dummy sync flag']
  #allocation4 [shape = 'u32[0]{0}', space=smem, size = 0, offset = 0, fixed_abs, tag = 'smem constant byte address 0x0 - null']
  %s0 = inlined_call_operand.hbm [shape: f32[2,4,16,16], index: 0, kind: input, shape index: {}]
  %s1 = inlined_call_operand.hbm [shape: f32[2,4,16,16], index: 1, kind: output, shape index: {}]
  %s2 = sld [smem:[#allocation0]]
  $region2: #{tpu_custom_call.1} parent=0
    _
  %s4 = ssub.s32 1, %s2
  %s5 = scalar_select 0, %s4, %s2
  %s7 = sshll.u32 1, 14
  %s8 = sxor.u32 4294967295, %s7
  %12 = dma.general %s0, 2048, %s1, [#allocation2], 131072, [#allocation4], 0, 0
  %s13 = smul.u32 2, 4
  %s14 = smul.u32 %s13, 16
  %s15 = smul.u32 %s14, 1
  %s16 = sshll.u32 %s15, 4
  %17 = dma.done [#allocation2], %s16
  %18 = vsyncmov [#allocation2]
  %s19 = vpop.sfrf %18
  %p20 = scmp.eq.s32.totalorder %s19, 0
  %p21 = pneg %p20
  %23 = shalt.err (%p21)

</llo_original>
